<compile_context>
chip_gen: v6e
topology: v6e:2x2x1
jax: 0.10.0
libtpu: 0.0.40
codegen_flags: <defaults>
</compile_context>

<pallas_src>
from typing import Any, NamedTuple, Optional

import jax
import jax.numpy as jnp
from jax.experimental import pallas as pl
from jax.experimental.pallas import tpu as pltpu


# ---------------------------------------------------------------------------
# Kernels
# ---------------------------------------------------------------------------
def _head_kernel_acc(x_ref, w_ref, b_ref, o_ref, acc_ref):
    """General path, grid = (batch, class, feature) tiles.

    INVARIANT: the feature (reduction) axis must remain the *innermost* grid
    axis and be marked "arbitrary"; the accumulator pattern below relies on it.
    """
    k = pl.program_id(2)

    @pl.when(k == 0)
    def _():
        acc_ref[...] = jnp.zeros_like(acc_ref)

    # x tile [tm, tk] @ w tile [tk, tn]; weight was pre-transposed to [F, C] in
    # the wrapper, so this is a plain NN matmul on the MXU (no XLU transpose).
    acc_ref[...] += jnp.dot(x_ref[...], w_ref[...],
                            preferred_element_type=jnp.float32)

    @pl.when(k == pl.num_programs(2) - 1)
    def _():
        o_ref[...] = (acc_ref[...] + b_ref[...]).astype(o_ref.dtype)


def _head_kernel_single_k(x_ref, w_ref, b_ref, o_ref):
    """Fast path (single contraction tile): no scratch accumulator / zero-init."""
    o_ref[...] = (jnp.dot(x_ref[...], w_ref[...],
                          preferred_element_type=jnp.float32)
                  + b_ref[...]).astype(o_ref.dtype)


# ---------------------------------------------------------------------------
# Tile planning helpers
# ---------------------------------------------------------------------------
_TM_MAX, _TN_MAX, _TK_MAX = 512, 1024, 2048
_SUBLANE = {1: 32, 2: 16, 4: 8}  # rows per native tile for the MXU input dtype


def _round_up(n, m):
    return ((n + m - 1) // m) * m


def _down_to(n, m):
    return max(m, (n // m) * m)


def _pick_tile(total, unit, max_tile):
    """Largest multiple of `unit` that divides `total` (a multiple of `unit`)
    and is <= max_tile; returns `total` itself when it already fits."""
    if total <= max_tile:
        return total
    m = total // unit
    best = 1
    d = 1
    while d * d <= m:
        if m % d == 0:
            for c in (d, m // d):
                if c * unit <= max_tile and c > best:
                    best = c
        d += 1
    return best * unit


def _vmem_budget_and_limit():
    """(tile-plan budget bytes, vmem_limit_bytes or None) per TPU generation."""
    try:
        cap = int(pltpu.get_tpu_info().vmem_capacity_bytes)
    except Exception:
        cap = 0
    if cap <= 0:
        # Unknown generation: plan conservatively, keep the compiler's default limit.
        return 20 * 1024 * 1024, None
    # ~48 MiB on v7x (64 MiB physical), ~96 MiB on v5e/v6e (128 MiB physical).
    limit = min(cap * 3 // 4, 96 * 1024 * 1024)
    # Leave headroom inside the limit for compiler-internal scratch / spills.
    return limit * 7 // 10, limit


def _footprint(tm, tn, tk, in_bytes):
    """Double-buffered x / w / out streams + f32 accumulator + bias (out/acc
    assumed f32 -> conservative for bf16 outputs)."""
    return ((2 * tm * tk + 2 * tk * tn) * in_bytes
            + 2 * tm * tn * 4          # output tiles (double-buffered)
            + tm * tn * 4              # f32 accumulator scratch
            + 2 * tn * 4)              # bias tile


def _plan_weight_tiles(F, C, in_bytes, budget):
    """Pick (tn, tk, C_pad, F_pad) from the VMEM budget, assuming the largest
    batch tile (tm = _TM_MAX) so the plan is valid for any batch size."""
    C_pad = _round_up(C, 128)                     # lane-dense output / weight
    F_pad = F if F <= _TK_MAX else _round_up(F, 128)
    tn = _pick_tile(C_pad, 128, _TN_MAX)
    tk = F_pad if F_pad <= _TK_MAX else _pick_tile(F_pad, 128, _TK_MAX)
    tm = _TM_MAX
    while _footprint(tm, tn, tk, in_bytes) > budget:
        if tk >= 256:
            if F_pad == F and F % 128:
                F_pad = _round_up(F, 128)         # pad F so tk can shrink legally
            tk = _pick_tile(F_pad, 128, max(128, tk // 2))
        elif tn >= 256:
            tn = _pick_tile(C_pad, 128, max(128, tn // 2))
        elif tm > 16:
            tm = max(16, tm // 2)
        else:
            break
    return tn, tk, C_pad, F_pad


# ---------------------------------------------------------------------------
# Parameter preparation (do once, reuse across forward calls)
# ---------------------------------------------------------------------------
class _PreparedHead(NamedTuple):
    weight: jax.Array          # [F_pad, C_pad], mxu dtype, transposed + zero padded
    bias: jax.Array            # [1, C_pad], float32
    num_classes: int
    in_features: int
    padded_classes: int
    padded_features: int
    tn: int
    tk: int
    budget: int
    vmem_limit: Optional[int]
    mxu_dtype: Any


def prepare_head_params(weight, bias, *, mxu_dtype=jnp.bfloat16):
    """Pad / transpose / cast the nn.Linear parameters once.

    Reuse the returned struct across forward calls so the weight-sized pad+cast
    HBM pass is not re-done per call and the kernel streams the weight in its
    final [F, C] mxu-dtype layout. mxu_dtype=jnp.float32 is the exact-parity
    escape hatch (slower MXU, no bf16 rounding).
    """
    C, F = weight.shape
    in_bytes = jnp.dtype(mxu_dtype).itemsize
    budget, vmem_limit = _vmem_budget_and_limit()
    tn, tk, C_pad, F_pad = _plan_weight_tiles(F, C, in_bytes, budget)

    wt = weight.T                                      # [F, C]: K on sublanes
    if (F_pad, C_pad) != (F, C):
        wt = jnp.pad(wt, ((0, F_pad - F), (0, C_pad - C)))   # zero pad: exact
    wt = wt.astype(mxu_dtype)

    b = bias.astype(jnp.float32)
    if C_pad != C:
        b = jnp.pad(b, (0, C_pad - C))
    b = b.reshape(1, C_pad)

    return _PreparedHead(weight=wt, bias=b, num_classes=C, in_features=F,
                         padded_classes=C_pad, padded_features=F_pad,
                         tn=tn, tk=tk, budget=budget, vmem_limit=vmem_limit,
                         mxu_dtype=mxu_dtype)


# ---------------------------------------------------------------------------
# Forward
# ---------------------------------------------------------------------------
def basic_head_apply(x, p: _PreparedHead):
    """x: [..., in_features] -> [..., num_classes] in x.dtype."""
    if x.ndim != 2:
        lead = x.shape[:-1]
        out = basic_head_apply(x.reshape(-1, x.shape[-1]), p)
        return out.reshape(*lead, p.num_classes)

    B, F = x.shape
    assert F == p.in_features, "in_features mismatch"
    out_dtype = x.dtype
    in_bytes = jnp.dtype(p.mxu_dtype).itemsize
    sub = _SUBLANE.get(in_bytes, 8)

    tn, tk = p.tn, p.tk
    C_pad, F_pad = p.padded_classes, p.padded_features

    # ---- batch tile: as large as the VMEM budget allows (fewer weight re-streams) ----
    tm = _pick_tile(_round_up(B, sub), sub, _TM_MAX)
    while tm > sub and _footprint(tm, tn, tk, in_bytes) > p.budget:
        tm = _pick_tile(_round_up(B, sub), 8, max(8, tm // 2))
    B_pad = _round_up(B, tm)

    gk = F_pad // tk

    # ---- v7x has 2 TensorCores: ensure a "parallel" axis of extent >= 2 when
    # ---- the head is big enough that splitting beats the extra grid steps.
    if B_pad // tm == 1 and C_pad // tn == 1 and B_pad * C_pad * F_pad >= (1 << 26):
        if tn >= 256 and (tn // 2) % 128 == 0 and C_pad % (tn // 2) == 0:
            tn //= 2
        else:
            new_tm = _down_to(tm // 2, 8)
            if new_tm < tm:
                tm = new_tm
                B_pad = _round_up(B, tm)
    gi, gj = B_pad // tm, C_pad // tn

    # ---- pad / cast the (small) activation stream; zero pad on K is exact ----
    xp = x
    if (B_pad, F_pad) != (B, F):
        xp = jnp.pad(x, ((0, B_pad - B), (0, F_pad - F)))
    xp = xp.astype(p.mxu_dtype)

    if gk == 1:
        # Single contraction tile: no accumulator scratch, write straight to out.
        # When gj == 1 the weight's block index is constant -> DMA'd exactly once.
        compiler_params = pltpu.CompilerParams(
            dimension_semantics=("parallel", "parallel"),
            vmem_limit_bytes=p.vmem_limit,
        )
        out = pl.pallas_call(
            _head_kernel_single_k,
            out_shape=jax.ShapeDtypeStruct((B_pad, C_pad), out_dtype),
            grid=(gi, gj),
            in_specs=[
                pl.BlockSpec((tm, F_pad), lambda i, j: (i, 0)),   # x
                pl.BlockSpec((F_pad, tn), lambda i, j: (0, j)),   # weight [F, C]
                pl.BlockSpec((1, tn), lambda i, j: (0, j)),       # bias
            ],
            out_specs=pl.BlockSpec((tm, tn), lambda i, j: (i, j)),
            compiler_params=compiler_params,
        )(xp, p.weight, p.bias)
    else:
        # Tiled reduction: f32 VMEM accumulator, init/finalize via pl.when.
        compiler_params = pltpu.CompilerParams(
            dimension_semantics=("parallel", "parallel", "arbitrary"),
            vmem_limit_bytes=p.vmem_limit,
        )
        out = pl.pallas_call(
            _head_kernel_acc,
            out_shape=jax.ShapeDtypeStruct((B_pad, C_pad), out_dtype),
            grid=(gi, gj, gk),
            in_specs=[
                pl.BlockSpec((tm, tk), lambda i, j, k: (i, k)),   # x
                pl.BlockSpec((tk, tn), lambda i, j, k: (k, j)),   # weight [F, C]
                pl.BlockSpec((1, tn), lambda i, j, k: (0, j)),    # bias
            ],
            out_specs=pl.BlockSpec((tm, tn), lambda i, j, k: (i, j)),
            scratch_shapes=[pltpu.VMEM((tm, tn), jnp.float32)],
            compiler_params=compiler_params,
        )(xp, p.weight, p.bias)

    return out[:B, :p.num_classes]


def basic_head_forward(x, weight, bias, *, mxu_dtype=jnp.bfloat16):
    """One-shot convenience wrapper (prepare + apply). For repeated calls, use
    prepare_head_params() once and reuse its result with basic_head_apply()."""
    return basic_head_apply(x, prepare_head_params(weight, bias, mxu_dtype=mxu_dtype))


# ---------------------------------------------------------------------------
# Self-test
# ---------------------------------------------------------------------------
if __name__ == "__main__":
    key = jax.random.PRNGKey(0)

    # ---- toy shapes implied by the module: batch=2, in_features=32, classes=8 ----
    B, F, C = 2, 32, 8
    kx, kw, kb = jax.random.split(key, 3)
    bound = 1.0 / jnp.sqrt(jnp.float32(F))
    weight = jax.random.uniform(kw, (C, F), jnp.float32, -bound, bound)
    bias = jax.random.uniform(kb, (C,), jnp.float32, -bound, bound)
    x = jax.random.normal(kx, (B, F), jnp.float32)

    prepared = prepare_head_params(weight, bias)      # pad/transpose/cast ONCE
    out = jax.block_until_ready(basic_head_apply(x, prepared))
    assert out.shape == (B, C)

    # Tight check vs. a reference doing the same math (bf16 inputs, f32 accumulate).
    x_bf = x.astype(jnp.bfloat16).astype(jnp.float32)
    w_bf = weight.astype(jnp.bfloat16).astype(jnp.float32)
    assert jnp.allclose(out, x_bf @ w_bf.T + bias, atol=1e-5, rtol=1e-5)
    # Loose sanity check vs. the full-precision f32 reference.
    assert jnp.allclose(out, x @ weight.T + bias, atol=3e-2, rtol=3e-2)

    # ---- second case exercising the tiled-reduction (3-D grid + accumulator) path ----
    B2, F2, C2 = 8, 2304, 136      # F2 exceeds one contraction tile -> grid-K > 1
    kx2, kw2, kb2 = jax.random.split(jax.random.PRNGKey(1), 3)
    bound2 = 1.0 / jnp.sqrt(jnp.float32(F2))
    weight2 = jax.random.uniform(kw2, (C2, F2), jnp.float32, -bound2, bound2)
    bias2 = jax.random.uniform(kb2, (C2,), jnp.float32, -bound2, bound2)
    x2 = jax.random.normal(kx2, (B2, F2), jnp.float32)

    out2 = jax.block_until_ready(basic_head_forward(x2, weight2, bias2))
    assert out2.shape == (B2, C2)
    x2_bf = x2.astype(jnp.bfloat16).astype(jnp.float32)
    w2_bf = weight2.astype(jnp.bfloat16).astype(jnp.float32)
    assert jnp.allclose(out2, x2_bf @ w2_bf.T + bias2, atol=1e-3, rtol=1e-3)
    assert jnp.allclose(out2, x2 @ weight2.T + bias2, atol=5e-2, rtol=5e-2)

    print("KERNEL_OK")
</pallas_src>

<mosaic_0001>
module attributes {stable_mosaic.version = 11 : i64} {
  func.func @_head_kernel_single_k(%arg0: i32, %arg1: i32, %arg2: memref<16x32xbf16, #tpu.memory_space<vmem>>, %arg3: memref<32x128xbf16, #tpu.memory_space<vmem>>, %arg4: memref<1x128xf32, #tpu.memory_space<vmem>>, %arg5: memref<16x128xf32, #tpu.memory_space<vmem>>) attributes {dimension_semantics = [#tpu.dimension_semantics<parallel>, #tpu.dimension_semantics<parallel>], iteration_bounds = array<i64: 1, 1>, scalar_prefetch = 0 : i64, scratch_operands = 0 : i64, tpu.core_type = #tpu.core_type<tc>, window_params = [{transform_indices = @transform_0, window_bounds = array<i64: 16, 32>}, {transform_indices = @transform_1, window_bounds = array<i64: 32, 128>}, {transform_indices = @transform_2, window_bounds = array<i64: 1, 128>}, {transform_indices = @transform_3, window_bounds = array<i64: 16, 128>}]} {
    %c0 = arith.constant 0 : index
    %c0_0 = arith.constant 0 : index
    %0 = vector.load %arg2[%c0, %c0_0] : memref<16x32xbf16, #tpu.memory_space<vmem>>, vector<16x32xbf16>
    %c0_1 = arith.constant 0 : index
    %c0_2 = arith.constant 0 : index
    %1 = vector.load %arg3[%c0_1, %c0_2] : memref<32x128xbf16, #tpu.memory_space<vmem>>, vector<32x128xbf16>
    %cst = arith.constant dense<0.000000e+00> : vector<16x128xf32>
    %2 = tpu.matmul %0, %1, %cst {dimension_numbers = #tpu.dot_dimension_numbers<[1], [0], [0], [1], [0, 0, 1, 1], [], []>} : vector<16x32xbf16>, vector<32x128xbf16>, vector<16x128xf32> -> vector<16x128xf32>
    %c0_3 = arith.constant 0 : index
    %c0_4 = arith.constant 0 : index
    %3 = vector.load %arg4[%c0_3, %c0_4] : memref<1x128xf32, #tpu.memory_space<vmem>>, vector<1x128xf32>
    %4 = vector.broadcast %3 : vector<1x128xf32> to vector<16x128xf32>
    %5 = arith.addf %2, %4 : vector<16x128xf32>
    %c0_5 = arith.constant 0 : index
    %c0_6 = arith.constant 0 : index
    %6 = vector.load %arg5[%c0_5, %c0_6] : memref<16x128xf32, #tpu.memory_space<vmem>>, vector<16x128xf32>
    tpu.vector_store %arg5[%c0_5, %c0_6], %5 {strides = array<i32>} : memref<16x128xf32, #tpu.memory_space<vmem>>, vector<16x128xf32>,
    return
  }
  func.func @transform_0(%arg0: i32, %arg1: i32) -> (i32, i32) {
    %c0_i32 = arith.constant 0 : i32
    %c0_i32_0 = arith.constant 0 : i32
    return %arg0, %c0_i32 : i32, i32
  }
  func.func @transform_1(%arg0: i32, %arg1: i32) -> (i32, i32) {
    %c0_i32 = arith.constant 0 : i32
    %c0_i32_0 = arith.constant 0 : i32
    return %c0_i32, %arg1 : i32, i32
  }
  func.func @transform_2(%arg0: i32, %arg1: i32) -> (i32, i32) {
    %c0_i32 = arith.constant 0 : i32
    %c0_i32_0 = arith.constant 0 : i32
    return %c0_i32, %arg1 : i32, i32
  }
  func.func @transform_3(%arg0: i32, %arg1: i32) -> (i32, i32) {
    %c0_i32 = arith.constant 0 : i32
    return %arg0, %arg1 : i32, i32
  }
}

</mosaic_0001>

<llo_original>
// kernel: tpu_custom_call.1
$region0: #{tpu_custom_call.1}
  #allocation0 [shape = 'u32[]', space=smem, size = 0x4, offset = 0x4, fixed_abs, tag = 'smem constant byte address 0x4 - core index']
  #allocation1 [shape = 'u32[144,128]{1,0:T(1,128)}', space=vmem, size = 0x12000, scoped, tag = 'internal scratch']
  %s0 = inlined_call_operand.hbm [shape: bf16[16,32], index: 0, kind: input, shape index: {}]
  %s1 = inlined_call_operand.hbm [shape: bf16[32,128], index: 1, kind: input, shape index: {}]
  %s2 = inlined_call_operand.vmem [shape: f32[1,128], index: 2, kind: input, shape index: {}]
  %s3 = inlined_call_operand.hbm [shape: f32[16,128], index: 3, kind: output, shape index: {}]
  %s4 = sld [smem:[#allocation0]]
  $region30: #{tpu_custom_call.1} parent=0
    _
  %s6 = ssub.s32 1, %s4
  %s7 = scalar_select 0, %s6, %s4
  $region1: #{tpu_custom_call.1} parent=0
    #allocation2 [shape = 'u8[4096]{0}', space=vmem, size = 0x1000, scoped, tag = 'input window, operand 0, single buffered']
    #allocation3 [shape = 's32[1]{0}', space=sflag, size = 0x4, scoped, tag = 'scoped memory for tpu_custom_call.1']
    #allocation4 [shape = 's32[1]{0}', space=sflag, size = 0x4, scoped, tag = 'scoped memory for tpu_custom_call.1']
    #allocation5 [shape = 'u8[8192]{0}', space=vmem, size = 0x2000, scoped, tag = 'input window, operand 1, single buffered']
    #allocation6 [shape = 's32[1]{0}', space=sflag, size = 0x4, scoped, tag = 'scoped memory for tpu_custom_call.1']
    #allocation7 [shape = 'u8[8192]{0}', space=vmem, size = 0x2000, scoped, tag = 'output window, operand 0, single buffered']
    %8 = vsyncpa [#allocation3], 0
    %9 = vsyncpa [#allocation6], 0
    %10 = vsyncpa [#allocation4], 0
    // Predicated region
    $region2: #{tpu_custom_call.1} parent=1 // pred_check
      _
    $region3: #{tpu_custom_call.1} parent=1 // pred_check_branch
      %12 = sbr.rel (0) target = $region5
    $region4: #{tpu_custom_call.1} parent=1 // pred_region
      %s14 = ssub.s32 128, 128
      %15 = vsyncadd [#allocation3], %s14
      %s16 = sshll.u32 [#allocation2], 4
      %s17 = int_to_ptr.vmem [resolvable:$true] %s16
      %22 = dma.hbm_to_vmem [thread:$0]  %s0, 128, %s17, [#allocation3], 64, 64, 4
    $region5: #{tpu_custom_call.1} parent=1 // pred_fallthru
      _
    // Predicated region
    $region6: #{tpu_custom_call.1} parent=1 // pred_check
      _
    $region7: #{tpu_custom_call.1} parent=1 // pred_check_branch
      %24 = sbr.rel (0) target = $region9
    $region8: #{tpu_custom_call.1} parent=1 // pred_region
      %s26 = ssub.s32 256, 256
      %27 = vsyncadd [#allocation6], %s26
      %s28 = sshll.u32 [#allocation5], 4
      %s29 = int_to_ptr.vmem [resolvable:$true] %s28
      %34 = dma.hbm_to_vmem [thread:$0]  %s1, 256, %s29, [#allocation6], 64, 64, 4
    $region9: #{tpu_custom_call.1} parent=1 // pred_fallthru
      _
    // Predicated region
    $region10: #{tpu_custom_call.1} parent=1 // pred_check
      _
    $region11: #{tpu_custom_call.1} parent=1 // pred_check_branch
      %36 = sbr.rel (0) target = $region13
    $region12: #{tpu_custom_call.1} parent=1 // pred_region
      _
    $region13: #{tpu_custom_call.1} parent=1 // pred_fallthru
      _
    // Predicated region
    $region14: #{tpu_custom_call.1} parent=1 // pred_check
      _
    $region15: #{tpu_custom_call.1} parent=1 // pred_check_branch
      %38 = sbr.rel (0) target = $region17
    $region16: #{tpu_custom_call.1} parent=1 // pred_region
      %39 = dma.done [#allocation3], 128
    $region17: #{tpu_custom_call.1} parent=1 // pred_fallthru
      _
    // Predicated region
    $region18: #{tpu_custom_call.1} parent=1 // pred_check
      _
    $region19: #{tpu_custom_call.1} parent=1 // pred_check_branch
      %41 = sbr.rel (0) target = $region21
    $region20: #{tpu_custom_call.1} parent=1 // pred_region
      %42 = dma.done [#allocation6], 256
    $region21: #{tpu_custom_call.1} parent=1 // pred_fallthru
      _
    %v44 = vld [vmem:[#allocation2] sm:$0xf]
    %v45 = vld [vmem:[#allocation2 + $0x4] sm:$0xf]
    %v46 = vld [vmem:[#allocation5] sm:$0xf]
    %v47 = vld [vmem:[#allocation5 + $0x4] sm:$0xf]
    %v48 = vld [vmem:[#allocation5 + $0x8] sm:$0xf]
    %v49 = vld [vmem:[#allocation5 + $0xc] sm:$0xf]
    %v50 = vld [vmem:[%s2] sm:$0x1]
    %v52 = vlaneseq
    %v53 = vshrl.u32 %v52, 7
    %v54 = vsub.s32 0, %v53
    %v55 = vrot.slane %v50, %v54
    %v59 = vunpack.c.l.b16 %v44
    %v60 = vunpack.c.l.b16 %v45
    %v61 = vpack.c.b16 %v60, %v59
    %v66 = vunpack.c.l.b16 %v46
    %v67 = vunpack.c.l.b16 %v47
    %v68 = vunpack.c.l.b16 %v48
    %v69 = vunpack.c.l.b16 %v49
    %v70 = vpack.c.b16 %v67, %v66
    %v71 = vpack.c.b16 %v69, %v68
    %vm74 = vcmask 261120
    %v76 = vsel %vm74, %v61, 0
    %78 = vmatprep.subr.bf16.mxu0 0
    %79 = vmatpush1.bf16.msra.mxu0 0
    %80 = vmatprep.subr.bf16.mxu0 0
    %81 = vmatpush1.bf16.msra.mxu0 0
    %82 = vmatprep.subr.bf16.mxu0 0
    %83 = vmatpush1.bf16.msra.mxu0 0
    %84 = vmatprep.subr.bf16.mxu0 0
    %85 = vmatpush1.bf16.msra.mxu0 0
    %86 = vmatprep.subr.bf16.mxu0 0
    %87 = vmatpush1.bf16.msra.mxu0 0
    %88 = vmatprep.subr.bf16.mxu0 0
    %89 = vmatpush1.bf16.msra.mxu0 0
    %90 = vmatprep.subr.bf16.mxu0 0
    %91 = vmatpush1.bf16.msra.mxu0 %v71
    %92 = vmatprep.subr.bf16.mxu0 0
    %93 = vmatpush1.bf16.msra.mxu0 %v70
    %94 = vmatprep.subr.bf16.mxu0 0
    %95 = vmatpush2.bf16.msra.mxu0 0
    %96 = vmatprep.subr.bf16.mxu0 0
    %97 = vmatpush2.bf16.msra.mxu0 0
    %98 = vmatprep.subr.bf16.mxu0 0
    %99 = vmatpush2.bf16.msra.mxu0 0
    %100 = vmatprep.subr.bf16.mxu0 0
    %101 = vmatpush2.bf16.msra.mxu0 0
    %102 = vmatprep.subr.bf16.mxu0 0
    %103 = vmatpush2.bf16.msra.mxu0 0
    %104 = vmatprep.subr.bf16.mxu0 0
    %105 = vmatpush2.bf16.msra.mxu0 0
    %106 = vmatprep.subr.bf16.mxu0 0
    %107 = vmatpush2.bf16.msra.mxu0 0
    %108 = vmatprep.subr.bf16.mxu0 0
    %109 = vmatpush2.bf16.msra.mxu0 0
    %110 = vmatprep.mubr.bf16.mxu0 0
    %111 = vmatmul.mubr.bf16.gmra.mxu0 %v76
    %v112 = vpop.f32.mrf.mxu0
    %v113 = vadd.f32 %v55, %v112
    %v114 = vpop.f32.mrf.mxu0
    %v115 = vpop.f32.mrf.mxu0
    %v116 = vadd.f32 %v55, %v115
    %v117 = vpop.f32.mrf.mxu0
    %118 = vdwg.mxu0
    %119 = vst [vmem:[#allocation7] sm:$0xff] %v113
    %120 = vst [vmem:[#allocation7 + $0x8] sm:$0xff] %v116
    // Predicated region
    $region22: #{tpu_custom_call.1} parent=1 // pred_check
      _
    $region23: #{tpu_custom_call.1} parent=1 // pred_check_branch
      %122 = sbr.rel (0) target = $region25
    $region24: #{tpu_custom_call.1} parent=1 // pred_region
      %s124 = ssub.s32 256, 256
      %125 = vsyncadd [#allocation4], %s124
      %s126 = sshll.u32 [#allocation7], 4
      %s127 = int_to_ptr.vmem [resolvable:$true] %s126
      %132 = dma.vmem_to_hbm [thread:$0]  %s127, 256, %s3, [#allocation4], 128, 128, 8
    $region25: #{tpu_custom_call.1} parent=1 // pred_fallthru
      _
    // Predicated region
    $region26: #{tpu_custom_call.1} parent=1 // pred_check
      _
    $region27: #{tpu_custom_call.1} parent=1 // pred_check_branch
      %134 = sbr.rel (0) target = $region29
    $region28: #{tpu_custom_call.1} parent=1 // pred_region
      %135 = dma.done [#allocation4], 256
    $region29: #{tpu_custom_call.1} parent=1 // pred_fallthru
      _
    %136 = vsyncpa [#allocation3], 1
    %137 = vsyncpa [#allocation6], 1
    %138 = vsyncpa [#allocation4], 1

</llo_original>
